<compile_context>
chip_gen: v7x
topology: tpu7x:2x2x1
jax: 0.10.0
libtpu: 0.0.40
codegen_flags: <defaults>
</compile_context>

<pallas_src>
import jax
import jax.numpy as jnp
from jax.experimental import pallas as pl
from jax.experimental.pallas import tpu as pltpu


def _sap_kernel(x_ref, w_ref, o_ref):
    # x_ref: (NB, T, H)  block of sequences, native dtype
    # w_ref: (1, H)      weight row of nn.Linear(H, 1)
    # o_ref: (NB, H)     pooled output block
    x = x_ref[...]                                        # (NB, T, H)
    w = w_ref[...].astype(x.dtype)                        # (1, H) -> broadcasts

    # Attention logits, lane-dense over T.  VPU multiply + XLU reduce over H,
    # accumulated in f32 (no persistent f32 copy of x).
    scores = jnp.sum(x * w, axis=-1, dtype=jnp.float32)   # (NB, T)
    # nn.Linear bias is constant across T -> cancels in softmax; omitted.

    # Numerically-stable softmax over T (lane axis).
    m = jnp.max(scores, axis=-1, keepdims=True)           # (NB, 1)
    e = jnp.exp(scores - m)                                # (NB, T)
    denom = jnp.sum(e, axis=-1, keepdims=True)             # (NB, 1)
    att = e * pl.reciprocal(denom, approx=False)            # (NB, T)

    # Weighted sum over T (sublane reduce), f32 accumulation against un-cast x.
    pooled = jnp.sum(x * att.astype(x.dtype)[:, :, None],
                     axis=1, dtype=jnp.float32)             # (NB, H)
    o_ref[...] = pooled.astype(o_ref.dtype)


def _choose_nb(N, T, H, itemsize):
    """Pick the per-step batch block: big enough to amortize grid overhead and
    fill sublanes, small enough that the double-buffered x block fits VMEM."""
    budget = 8 * 1024 * 1024                       # single-buffer x budget
    nb = budget // max(1, T * H * itemsize)
    nb = int(max(8, min(nb, 128)))                 # >=8 rows for dense stores
    nb -= nb % 8                                   # sublane-aligned batch block
    n_ceil = ((N + 7) // 8) * 8                    # don't pad batch needlessly
    return max(8, min(nb, max(8, n_ceil)))
    # TODO(synk): if T*H is so large that an (8, T, H) block exceeds VMEM,
    # the T axis would additionally need tiling (not needed for these shapes).


def self_attention_pooling(batch_rep, w, b=None):
    """batch_rep: (N, T, H); w: (1, H) Linear weight; b: (1,) Linear bias.

    `b` is accepted for API parity with the PyTorch module but is not used:
    a scalar added to every score over T cancels inside the softmax.
    """
    del b
    N, T, H = batch_rep.shape
    itemsize = jnp.dtype(batch_rep.dtype).itemsize
    NB = _choose_nb(N, T, H, itemsize)
    n_blocks = pl.cdiv(N, NB)
    N_pad = n_blocks * NB

    x = batch_rep
    if N_pad != N:
        # Zero rows give a uniform softmax and a zero pooled vector; they are
        # sliced off below, so padding is safe (no NaNs, no cross-row coupling).
        x = jnp.pad(x, ((0, N_pad - N), (0, 0), (0, 0)))
    w_row = w.reshape(1, H)

    out = pl.pallas_call(
        _sap_kernel,
        out_shape=jax.ShapeDtypeStruct((N_pad, H), batch_rep.dtype),
        grid_spec=pltpu.PrefetchScalarGridSpec(
            num_scalar_prefetch=0,
            grid=(n_blocks,),
            in_specs=[
                pl.BlockSpec((NB, T, H), lambda n: (n, 0, 0)),  # batch block
                pl.BlockSpec((1, H), lambda n: (0, 0)),         # shared weight
            ],
            out_specs=pl.BlockSpec((NB, H), lambda n: (n, 0)),
        ),
        compiler_params=pltpu.CompilerParams(
            dimension_semantics=("parallel",),       # lets v7x shard across TCs
            vmem_limit_bytes=32 * 1024 * 1024,       # raise v5e's 16 MiB default
        ),
    )(x, w_row)

    return out[:N] if N_pad != N else out


def _reference(batch_rep, w, b):
    # plain-JAX reference of the PyTorch forward (bias kept to prove it cancels)
    scores = jnp.einsum("nth,h->nt", batch_rep, w[0]) + b[0]      # (N, T)
    att = jax.nn.softmax(scores, axis=-1)[..., None]              # (N, T, 1)
    return jnp.sum(batch_rep * att, axis=1)                       # (N, H)


if __name__ == "__main__":
    key = jax.random.PRNGKey(0)
    k_x, k_w, k_b = jax.random.split(key, 3)

    N, T, H = 2, 8, 32
    x = jax.random.normal(k_x, (N, T, H), dtype=jnp.float32)

    # deterministic init of nn.Linear(H, 1): weight (1, H), bias (1,)
    bound = 1.0 / (H ** 0.5)
    w = jax.random.uniform(k_w, (1, H), minval=-bound, maxval=bound,
                           dtype=jnp.float32)
    b = jax.random.uniform(k_b, (1,), minval=-bound, maxval=bound,
                           dtype=jnp.float32)

    out = self_attention_pooling(x, w, b)
    out = jax.block_until_ready(out)

    ref = _reference(x, w, b)
    assert out.shape == (N, H)
    assert jnp.allclose(out, ref, atol=1e-5, rtol=1e-5)

    print("KERNEL_OK")
</pallas_src>

<mosaic_0001>
module attributes {stable_mosaic.version = 11 : i64} {
  func.func @_sap_kernel(%arg0: i32, %arg1: memref<8x8x32xf32, #tpu.memory_space<vmem>>, %arg2: memref<1x32xf32, #tpu.memory_space<vmem>>, %arg3: memref<8x32xf32, #tpu.memory_space<vmem>>) attributes {dimension_semantics = [#tpu.dimension_semantics<parallel>], iteration_bounds = array<i64: 1>, scalar_prefetch = 0 : i64, scratch_operands = 0 : i64, tpu.core_type = #tpu.core_type<tc>, window_params = [{transform_indices = @transform_0, window_bounds = array<i64: 8, 8, 32>}, {pipeline_mode = #tpu.pipeline_mode<synchronous>, transform_indices = @transform_1, window_bounds = array<i64: 1, 32>}, {transform_indices = @transform_2, window_bounds = array<i64: 8, 32>}]} {
    %c0 = arith.constant 0 : index
    %c0_0 = arith.constant 0 : index
    %c0_1 = arith.constant 0 : index
    %0 = vector.load %arg1[%c0, %c0_0, %c0_1] : memref<8x8x32xf32, #tpu.memory_space<vmem>>, vector<8x8x32xf32>
    %c0_2 = arith.constant 0 : index
    %c0_3 = arith.constant 0 : index
    %1 = vector.load %arg2[%c0_2, %c0_3] : memref<1x32xf32, #tpu.memory_space<vmem>>, vector<1x32xf32>
    %2 = vector.shape_cast %1 : vector<1x32xf32> to vector<1x1x32xf32>
    %3 = vector.broadcast %2 : vector<1x1x32xf32> to vector<8x8x32xf32>
    %4 = arith.mulf %0, %3 : vector<8x8x32xf32>
    %cst = arith.constant dense<0.000000e+00> : vector<8x8xf32>
    %5 = vector.multi_reduction <add>, %4, %cst [2] : vector<8x8x32xf32> to vector<8x8xf32>
    %cst_4 = arith.constant dense<0xFF800000> : vector<8xf32>
    %6 = vector.multi_reduction <maximumf>, %5, %cst_4 [1] : vector<8x8xf32> to vector<8xf32>
    %7 = vector.shape_cast %6 : vector<8xf32> to vector<8x1xf32>
    %8 = vector.broadcast %7 : vector<8x1xf32> to vector<8x8xf32>
    %9 = arith.subf %5, %8 : vector<8x8xf32>
    %10 = math.exp %9 : vector<8x8xf32>
    %cst_5 = arith.constant dense<0.000000e+00> : vector<8xf32>
    %11 = vector.multi_reduction <add>, %10, %cst_5 [1] : vector<8x8xf32> to vector<8xf32>
    %12 = vector.shape_cast %11 : vector<8xf32> to vector<8x1xf32>
    %13 = tpu.reciprocal %12 : vector<8x1xf32> -> vector<8x1xf32>
    %14 = vector.broadcast %13 : vector<8x1xf32> to vector<8x8xf32>
    %15 = arith.mulf %10, %14 : vector<8x8xf32>
    %16 = vector.shape_cast %15 : vector<8x8xf32> to vector<8x8x1xf32>
    %17 = vector.broadcast %16 : vector<8x8x1xf32> to vector<8x8x32xf32>
    %18 = arith.mulf %0, %17 : vector<8x8x32xf32>
    %cst_6 = arith.constant dense<0.000000e+00> : vector<8x32xf32>
    %19 = vector.multi_reduction <add>, %18, %cst_6 [1] : vector<8x8x32xf32> to vector<8x32xf32>
    %c0_7 = arith.constant 0 : index
    %c0_8 = arith.constant 0 : index
    %20 = vector.load %arg3[%c0_7, %c0_8] : memref<8x32xf32, #tpu.memory_space<vmem>>, vector<8x32xf32>
    tpu.vector_store %arg3[%c0_7, %c0_8], %19 {strides = array<i32>} : memref<8x32xf32, #tpu.memory_space<vmem>>, vector<8x32xf32>,
    return
  }
  func.func @transform_0(%arg0: i32) -> (i32, i32, i32) {
    %c0_i32 = arith.constant 0 : i32
    %c0_i32_0 = arith.constant 0 : i32
    %c0_i32_1 = arith.constant 0 : i32
    return %arg0, %c0_i32, %c0_i32_0 : i32, i32, i32
  }
  func.func @transform_1(%arg0: i32) -> (i32, i32) {
    %c0_i32 = arith.constant 0 : i32
    %c0_i32_0 = arith.constant 0 : i32
    %c0_i32_1 = arith.constant 0 : i32
    return %c0_i32, %c0_i32_0 : i32, i32
  }
  func.func @transform_2(%arg0: i32) -> (i32, i32) {
    %c0_i32 = arith.constant 0 : i32
    %c0_i32_0 = arith.constant 0 : i32
    return %arg0, %c0_i32 : i32, i32
  }
}

</mosaic_0001>

<llo_original>
// kernel: tpu_custom_call.1
$region0: #{tpu_custom_call.1}
  #allocation0 [shape = 'u32[]', space=smem, size = 0x4, offset = 0x4, fixed_abs, tag = 'smem constant byte address 0x4 - core index']
  #allocation1 [shape = 'u32[144,128]{1,0:T(1,128)}', space=vmem, size = 0x12000, scoped, tag = 'internal scratch']
  %s0 = inlined_call_operand.hbm [shape: f32[8,8,32], index: 0, kind: input, shape index: {}]
  %s1 = inlined_call_operand.vmem [shape: f32[1,32], index: 1, kind: input, shape index: {}]
  %s2 = inlined_call_operand.hbm [shape: f32[8,32], index: 2, kind: output, shape index: {}]
  %s3 = sld [smem:[#allocation0]]
  $region22: #{tpu_custom_call.1} parent=0
    _
  %s5 = ssub.s32 1, %s3
  %s6 = scalar_select 0, %s5, %s3
  $region1: #{tpu_custom_call.1} parent=0
    #allocation2 [shape = 'u8[32768]{0}', space=vmem, size = 0x8000, scoped, tag = 'input window, operand 0, single buffered']
    #allocation3 [shape = 's32[1]{0}', space=sflag, size = 0x4, scoped, tag = 'scoped memory for tpu_custom_call.1']
    #allocation4 [shape = 's32[1]{0}', space=sflag, size = 0x4, scoped, tag = 'scoped memory for tpu_custom_call.1']
    #allocation5 [shape = 'u8[4096]{0}', space=vmem, size = 0x1000, scoped, tag = 'output window, operand 0, single buffered']
    %7 = vsyncpa [#allocation3], 0
    %8 = vsyncpa [#allocation4], 0
    // Predicated region
    $region2: #{tpu_custom_call.1} parent=1 // pred_check
      _
    $region3: #{tpu_custom_call.1} parent=1 // pred_check_branch
      %10 = sbr.rel (0) target = $region5
    $region4: #{tpu_custom_call.1} parent=1 // pred_region
      %s12 = ssub.s32 1024, 1024
      %13 = vsyncadd [#allocation3], %s12
      %s14 = sshll.u32 [#allocation2], 4
      %s15 = int_to_ptr.vmem [resolvable:$true] %s14
      %20 = dma.hbm_to_vmem [thread:$0]  %s0, 1024, %s15, [#allocation3], 128, 128, 8
    $region5: #{tpu_custom_call.1} parent=1 // pred_fallthru
      _
    // Predicated region
    $region6: #{tpu_custom_call.1} parent=1 // pred_check
      _
    $region7: #{tpu_custom_call.1} parent=1 // pred_check_branch
      %22 = sbr.rel (0) target = $region9
    $region8: #{tpu_custom_call.1} parent=1 // pred_region
      _
    $region9: #{tpu_custom_call.1} parent=1 // pred_fallthru
      _
    // Predicated region
    $region10: #{tpu_custom_call.1} parent=1 // pred_check
      _
    $region11: #{tpu_custom_call.1} parent=1 // pred_check_branch
      %24 = sbr.rel (0) target = $region13
    $region12: #{tpu_custom_call.1} parent=1 // pred_region
      %25 = dma.done [#allocation3], 1024
    $region13: #{tpu_custom_call.1} parent=1 // pred_fallthru
      _
    %v26 = vld [vmem:[#allocation2] sm:$0xff]
    %v27 = vld [vmem:[#allocation2 + $0x8] sm:$0xff]
    %v28 = vld [vmem:[#allocation2 + $0x10] sm:$0xff]
    %v29 = vld [vmem:[#allocation2 + $0x18] sm:$0xff]
    %v30 = vld [vmem:[#allocation2 + $0x20] sm:$0xff]
    %v31 = vld [vmem:[#allocation2 + $0x28] sm:$0xff]
    %v32 = vld [vmem:[#allocation2 + $0x30] sm:$0xff]
    %v33 = vld [vmem:[#allocation2 + $0x38] sm:$0xff]
    %v34 = vld [vmem:[%s1] sm:$0x1]
    %v36 = vlaneseq
    %v37 = vshrl.u32 %v36, 7
    %v38 = vsub.s32 0, %v37
    %v39 = vrot.slane %v34, %v38
    %v41 = vmul.f32 %v26, %v39
    %v42 = vmul.f32 %v27, %v39
    %v43 = vmul.f32 %v28, %v39
    %v44 = vmul.f32 %v29, %v39
    %v45 = vmul.f32 %v30, %v39
    %v46 = vmul.f32 %v31, %v39
    %v47 = vmul.f32 %v32, %v39
    %v48 = vmul.f32 %v33, %v39
    %vm49 = vcmask 261120
    %v50 = vsel %vm49, %v41, 0.0
    %51 = vadd.xlane.f32.xlu0 %v50
    %v52 = vpop.xlane.xlu0 %51
    %v53 = vsel %vm49, %v42, 0.0
    %54 = vadd.xlane.f32.xlu0 %v53
    %v55 = vpop.xlane.xlu0 %54
    %v56 = vsel %vm49, %v43, 0.0
    %57 = vadd.xlane.f32.xlu0 %v56
    %v58 = vpop.xlane.xlu0 %57
    %v59 = vsel %vm49, %v44, 0.0
    %60 = vadd.xlane.f32.xlu0 %v59
    %v61 = vpop.xlane.xlu0 %60
    %v62 = vsel %vm49, %v45, 0.0
    %63 = vadd.xlane.f32.xlu0 %v62
    %v64 = vpop.xlane.xlu0 %63
    %v65 = vsel %vm49, %v46, 0.0
    %66 = vadd.xlane.f32.xlu0 %v65
    %v67 = vpop.xlane.xlu0 %66
    %v68 = vsel %vm49, %v47, 0.0
    %69 = vadd.xlane.f32.xlu0 %v68
    %v70 = vpop.xlane.xlu0 %69
    %v71 = vsel %vm49, %v48, 0.0
    %72 = vadd.xlane.f32.xlu0 %v71
    %v73 = vpop.xlane.xlu0 %72
    %v82 = vlaneseq
    %v83 = vand.u32 %v82, 127
    %v84 = vlaneseq
    %v85 = vshrl.u32 %v84, 7
    %v86 = vsub.s32 %v83, %v85
    %v87 = vrot.slane %v52, %v86
    %v88 = vlaneseq
    %v89 = vshrl.u32 %v88, 7
    %v90 = vsub.s32 %v83, %v89
    %v91 = vrot.slane %v55, %v90
    %v92 = vlaneseq
    %v93 = vshrl.u32 %v92, 7
    %v94 = vsub.s32 %v83, %v93
    %v95 = vrot.slane %v58, %v94
    %v96 = vlaneseq
    %v97 = vshrl.u32 %v96, 7
    %v98 = vsub.s32 %v83, %v97
    %v99 = vrot.slane %v61, %v98
    %v100 = vlaneseq
    %v101 = vshrl.u32 %v100, 7
    %v102 = vsub.s32 %v83, %v101
    %v103 = vrot.slane %v64, %v102
    %v104 = vlaneseq
    %v105 = vshrl.u32 %v104, 7
    %v106 = vsub.s32 %v83, %v105
    %v107 = vrot.slane %v67, %v106
    %v108 = vlaneseq
    %v109 = vshrl.u32 %v108, 7
    %v110 = vsub.s32 %v83, %v109
    %v111 = vrot.slane %v70, %v110
    %v112 = vlaneseq
    %v113 = vshrl.u32 %v112, 7
    %v114 = vsub.s32 %v83, %v113
    %v115 = vrot.slane %v73, %v114
    %vm116 = vcmask 1041409
    %v117 = vsel %vm116, %v91, %v87
    %vm118 = vcmask 1042434
    %v119 = vsel %vm118, %v95, %v117
    %vm120 = vcmask 1043459
    %v121 = vsel %vm120, %v99, %v119
    %vm122 = vcmask 1044484
    %v123 = vsel %vm122, %v103, %v121
    %vm124 = vcmask 1045509
    %v125 = vsel %vm124, %v107, %v123
    %vm126 = vcmask 1046534
    %v127 = vsel %vm126, %v111, %v125
    %vm128 = vcmask 1047559
    %v129 = vsel %vm128, %v115, %v127
    %vm131 = vcmask 64512
    %v132 = vsel %vm131, %v129, -inf
    %133 = vmax.xlane.f32.xlu0 %v132
    %v134 = vpop.xlane.xlu0 %133
    %v136 = vlaneseq
    %v137 = vshrl.u32 %v136, 7
    %v138 = vsub.s32 0, %v137
    %v139 = vrot.slane %v134, %v138
    %v140 = vlaneseq
    %v141 = vshrl.u32 %v140, 7
    %v142 = vsub.s32 1, %v141
    %v143 = vrot.slane %v134, %v142
    %v144 = vlaneseq
    %v145 = vshrl.u32 %v144, 7
    %v146 = vsub.s32 2, %v145
    %v147 = vrot.slane %v134, %v146
    %v148 = vlaneseq
    %v149 = vshrl.u32 %v148, 7
    %v150 = vsub.s32 3, %v149
    %v151 = vrot.slane %v134, %v150
    %v152 = vlaneseq
    %v153 = vshrl.u32 %v152, 7
    %v154 = vsub.s32 4, %v153
    %v155 = vrot.slane %v134, %v154
    %v156 = vlaneseq
    %v157 = vshrl.u32 %v156, 7
    %v158 = vsub.s32 5, %v157
    %v159 = vrot.slane %v134, %v158
    %v160 = vlaneseq
    %v161 = vshrl.u32 %v160, 7
    %v162 = vsub.s32 6, %v161
    %v163 = vrot.slane %v134, %v162
    %v164 = vlaneseq
    %v165 = vshrl.u32 %v164, 7
    %v166 = vsub.s32 7, %v165
    %v167 = vrot.slane %v134, %v166
    %v176 = vsub.f32 %v52, %v139
    %v177 = vsub.f32 %v55, %v143
    %v178 = vsub.f32 %v58, %v147
    %v179 = vsub.f32 %v61, %v151
    %v180 = vsub.f32 %v64, %v155
    %v181 = vsub.f32 %v67, %v159
    %v182 = vsub.f32 %v70, %v163
    %v183 = vsub.f32 %v73, %v167
    %v184 = vmul.f32 %v176, 1.442695
    %v185 = vpow.pop %v184
    %v186 = vmul.f32 %v177, 1.442695
    %v187 = vpow.pop %v186
    %v188 = vmul.f32 %v178, 1.442695
    %v189 = vpow.pop %v188
    %v190 = vmul.f32 %v179, 1.442695
    %v191 = vpow.pop %v190
    %v192 = vmul.f32 %v180, 1.442695
    %v193 = vpow.pop %v192
    %v194 = vmul.f32 %v181, 1.442695
    %v195 = vpow.pop %v194
    %v196 = vmul.f32 %v182, 1.442695
    %v197 = vpow.pop %v196
    %v198 = vmul.f32 %v183, 1.442695
    %v199 = vpow.pop %v198
    %208 = vset.pattern.permute.xlu0 0
    %209 = vperm.xlu0 %208, %v185
    %v210 = vpop.permute.xlu0 %209
    %211 = vset.pattern.permute.xlu0 0
    %212 = vperm.xlu0 %211, %v187
    %v213 = vpop.permute.xlu0 %212
    %214 = vset.pattern.permute.xlu0 0
    %215 = vperm.xlu0 %214, %v189
    %v216 = vpop.permute.xlu0 %215
    %217 = vset.pattern.permute.xlu0 0
    %218 = vperm.xlu0 %217, %v191
    %v219 = vpop.permute.xlu0 %218
    %220 = vset.pattern.permute.xlu0 0
    %221 = vperm.xlu0 %220, %v193
    %v222 = vpop.permute.xlu0 %221
    %223 = vset.pattern.permute.xlu0 0
    %224 = vperm.xlu0 %223, %v195
    %v225 = vpop.permute.xlu0 %224
    %226 = vset.pattern.permute.xlu0 0
    %227 = vperm.xlu0 %226, %v197
    %v228 = vpop.permute.xlu0 %227
    %229 = vset.pattern.permute.xlu0 0
    %230 = vperm.xlu0 %229, %v199
    %v231 = vpop.permute.xlu0 %230
    %v232 = vlaneseq
    %v233 = vshrl.u32 %v232, 7
    %v234 = vsub.s32 %v83, %v233
    %v235 = vrot.slane %v210, %v234
    %v236 = vlaneseq
    %v237 = vshrl.u32 %v236, 7
    %v238 = vsub.s32 %v83, %v237
    %v239 = vrot.slane %v213, %v238
    %v240 = vlaneseq
    %v241 = vshrl.u32 %v240, 7
    %v242 = vsub.s32 %v83, %v241
    %v243 = vrot.slane %v216, %v242
    %v244 = vlaneseq
    %v245 = vshrl.u32 %v244, 7
    %v246 = vsub.s32 %v83, %v245
    %v247 = vrot.slane %v219, %v246
    %v248 = vlaneseq
    %v249 = vshrl.u32 %v248, 7
    %v250 = vsub.s32 %v83, %v249
    %v251 = vrot.slane %v222, %v250
    %v252 = vlaneseq
    %v253 = vshrl.u32 %v252, 7
    %v254 = vsub.s32 %v83, %v253
    %v255 = vrot.slane %v225, %v254
    %v256 = vlaneseq
    %v257 = vshrl.u32 %v256, 7
    %v258 = vsub.s32 %v83, %v257
    %v259 = vrot.slane %v228, %v258
    %v260 = vlaneseq
    %v261 = vshrl.u32 %v260, 7
    %v262 = vsub.s32 %v83, %v261
    %v263 = vrot.slane %v231, %v262
    %v264 = vsel %vm116, %v239, %v235
    %v265 = vsel %vm118, %v243, %v264
    %v266 = vsel %vm120, %v247, %v265
    %v267 = vsel %vm122, %v251, %v266
    %v268 = vsel %vm124, %v255, %v267
    %v269 = vsel %vm126, %v259, %v268
    %v270 = vsel %vm128, %v263, %v269
    %v272 = vsel %vm131, %v270, 0.0
    %273 = vadd.xlane.f32.xlu0 %v272
    %v274 = vpop.xlane.xlu0 %273
    %v275 = vrcp.pop %v274
    %v277 = vlaneseq
    %v278 = vshrl.u32 %v277, 7
    %v279 = vsub.s32 0, %v278
    %v280 = vrot.slane %v275, %v279
    %v281 = vlaneseq
    %v282 = vshrl.u32 %v281, 7
    %v283 = vsub.s32 1, %v282
    %v284 = vrot.slane %v275, %v283
    %v285 = vlaneseq
    %v286 = vshrl.u32 %v285, 7
    %v287 = vsub.s32 2, %v286
    %v288 = vrot.slane %v275, %v287
    %v289 = vlaneseq
    %v290 = vshrl.u32 %v289, 7
    %v291 = vsub.s32 3, %v290
    %v292 = vrot.slane %v275, %v291
    %v293 = vlaneseq
    %v294 = vshrl.u32 %v293, 7
    %v295 = vsub.s32 4, %v294
    %v296 = vrot.slane %v275, %v295
    %v297 = vlaneseq
    %v298 = vshrl.u32 %v297, 7
    %v299 = vsub.s32 5, %v298
    %v300 = vrot.slane %v275, %v299
    %v301 = vlaneseq
    %v302 = vshrl.u32 %v301, 7
    %v303 = vsub.s32 6, %v302
    %v304 = vrot.slane %v275, %v303
    %v305 = vlaneseq
    %v306 = vshrl.u32 %v305, 7
    %v307 = vsub.s32 7, %v306
    %v308 = vrot.slane %v275, %v307
    %v317 = vmul.f32 %v185, %v280
    %v318 = vmul.f32 %v187, %v284
    %v319 = vmul.f32 %v189, %v288
    %v320 = vmul.f32 %v191, %v292
    %v321 = vmul.f32 %v193, %v296
    %v322 = vmul.f32 %v195, %v300
    %v323 = vmul.f32 %v197, %v304
    %v324 = vmul.f32 %v199, %v308
    %326 = vset.pattern.permute.xlu0 0
    %327 = vperm.xlu0 %326, %v317
    %v328 = vpop.permute.xlu0 %327
    %331 = vset.pattern.permute.xlu0 0
    %332 = vperm.xlu0 %331, %v318
    %v333 = vpop.permute.xlu0 %332
    %336 = vset.pattern.permute.xlu0 0
    %337 = vperm.xlu0 %336, %v319
    %v338 = vpop.permute.xlu0 %337
    %341 = vset.pattern.permute.xlu0 0
    %342 = vperm.xlu0 %341, %v320
    %v343 = vpop.permute.xlu0 %342
    %346 = vset.pattern.permute.xlu0 0
    %347 = vperm.xlu0 %346, %v321
    %v348 = vpop.permute.xlu0 %347
    %351 = vset.pattern.permute.xlu0 0
    %352 = vperm.xlu0 %351, %v322
    %v353 = vpop.permute.xlu0 %352
    %356 = vset.pattern.permute.xlu0 0
    %357 = vperm.xlu0 %356, %v323
    %v358 = vpop.permute.xlu0 %357
    %361 = vset.pattern.permute.xlu0 0
    %362 = vperm.xlu0 %361, %v324
    %v363 = vpop.permute.xlu0 %362
    %v365 = vmul.f32 %v26, %v328
    %v366 = vmul.f32 %v27, %v333
    %v367 = vmul.f32 %v28, %v338
    %v368 = vmul.f32 %v29, %v343
    %v369 = vmul.f32 %v30, %v348
    %v370 = vmul.f32 %v31, %v353
    %v371 = vmul.f32 %v32, %v358
    %v372 = vmul.f32 %v33, %v363
    %v373 = vsel %vm49, %v365, 0.0
    %v374 = vrot.slane %v373, 4
    %v375 = vadd.f32 %v373, %v374
    %v376 = vrot.slane %v375, 2
    %v377 = vadd.f32 %v375, %v376
    %v378 = vrot.slane %v377, 1
    %v379 = vadd.f32 %v377, %v378
    %v380 = vsel %vm49, %v366, 0.0
    %v381 = vrot.slane %v380, 4
    %v382 = vadd.f32 %v380, %v381
    %v383 = vrot.slane %v382, 2
    %v384 = vadd.f32 %v382, %v383
    %v385 = vrot.slane %v384, 1
    %v386 = vadd.f32 %v384, %v385
    %v387 = vsel %vm49, %v367, 0.0
    %v388 = vrot.slane %v387, 4
    %v389 = vadd.f32 %v387, %v388
    %v390 = vrot.slane %v389, 2
    %v391 = vadd.f32 %v389, %v390
    %v392 = vrot.slane %v391, 1
    %v393 = vadd.f32 %v391, %v392
    %v394 = vsel %vm49, %v368, 0.0
    %v395 = vrot.slane %v394, 4
    %v396 = vadd.f32 %v394, %v395
    %v397 = vrot.slane %v396, 2
    %v398 = vadd.f32 %v396, %v397
    %v399 = vrot.slane %v398, 1
    %v400 = vadd.f32 %v398, %v399
    %v401 = vsel %vm49, %v369, 0.0
    %v402 = vrot.slane %v401, 4
    %v403 = vadd.f32 %v401, %v402
    %v404 = vrot.slane %v403, 2
    %v405 = vadd.f32 %v403, %v404
    %v406 = vrot.slane %v405, 1
    %v407 = vadd.f32 %v405, %v406
    %v408 = vsel %vm49, %v370, 0.0
    %v409 = vrot.slane %v408, 4
    %v410 = vadd.f32 %v408, %v409
    %v411 = vrot.slane %v410, 2
    %v412 = vadd.f32 %v410, %v411
    %v413 = vrot.slane %v412, 1
    %v414 = vadd.f32 %v412, %v413
    %v415 = vsel %vm49, %v371, 0.0
    %v416 = vrot.slane %v415, 4
    %v417 = vadd.f32 %v415, %v416
    %v418 = vrot.slane %v417, 2
    %v419 = vadd.f32 %v417, %v418
    %v420 = vrot.slane %v419, 1
    %v421 = vadd.f32 %v419, %v420
    %v422 = vsel %vm49, %v372, 0.0
    %v423 = vrot.slane %v422, 4
    %v424 = vadd.f32 %v422, %v423
    %v425 = vrot.slane %v424, 2
    %v426 = vadd.f32 %v424, %v425
    %v427 = vrot.slane %v426, 1
    %v428 = vadd.f32 %v426, %v427
    %v437 = vsel %vm116, %v386, %v379
    %v438 = vsel %vm118, %v393, %v437
    %v439 = vsel %vm120, %v400, %v438
    %v440 = vsel %vm122, %v407, %v439
    %v441 = vsel %vm124, %v414, %v440
    %v442 = vsel %vm126, %v421, %v441
    %v443 = vsel %vm128, %v428, %v442
    %445 = vst.msk [vmem:[#allocation5] sm:$0xff] %vm49, %v443
    // Predicated region
    $region14: #{tpu_custom_call.1} parent=1 // pred_check
      _
    $region15: #{tpu_custom_call.1} parent=1 // pred_check_branch
      %447 = sbr.rel (0) target = $region17
    $region16: #{tpu_custom_call.1} parent=1 // pred_region
      %s449 = ssub.s32 128, 128
      %450 = vsyncadd [#allocation4], %s449
      %s452 = sshll.u32 [#allocation5], 4
      %s453 = int_to_ptr.vmem [resolvable:$true] %s452
      %455 = dma.vmem_to_hbm [thread:$0]  %s453, 128, %s2, [#allocation4]
    $region17: #{tpu_custom_call.1} parent=1 // pred_fallthru
      _
    // Predicated region
    $region18: #{tpu_custom_call.1} parent=1 // pred_check
      _
    $region19: #{tpu_custom_call.1} parent=1 // pred_check_branch
      %457 = sbr.rel (0) target = $region21
    $region20: #{tpu_custom_call.1} parent=1 // pred_region
      %458 = dma.done [#allocation4], 128
    $region21: #{tpu_custom_call.1} parent=1 // pred_fallthru
      _
    %459 = vsyncpa [#allocation3], 1
    %460 = vsyncpa [#allocation4], 1

</llo_original>
